<compile_context>
chip_gen: v7x
topology: tpu7x:2x2x1
jax: 0.10.0
libtpu: 0.0.40
codegen_flags: <defaults>
</compile_context>

<pallas_src>
import functools

import jax
import jax.numpy as jnp
from jax.experimental import pallas as pl
from jax.experimental.pallas import tpu as pltpu

BN_EPS = 1e-5  # torch.nn.BatchNorm1d default


def _vmem_limit_bytes():
    """Per-generation VMEM limit: ~5/8 of physical capacity, capped at 96 MiB."""
    try:
        cap = pltpu.get_tpu_info().vmem_capacity_bytes
    except Exception:
        cap = 128 * 1024 * 1024
    return int(min(cap * 5 // 8, 96 * 1024 * 1024))


def _choose_query_tile(n):
    """Query-row tile for pass 1 (flash-style). Full N when it is small."""
    for tq in (512, 256, 128):
        if n % tq == 0:
            return tq
    return n


def _choose_channel_tile(b, c, n, x_itemsize, y_itemsize, budget_bytes):
    """Largest channel tile (divisor of C, multiple of 8 or == C) fitting budget."""
    per_channel = 2 * b * n * (y_itemsize + 2 * x_itemsize)  # double-buffered y,x,out
    candidates = [tc for tc in range(c, 0, -1)
                  if c % tc == 0 and (tc == c or tc % 8 == 0)]
    for tc in candidates:
        if tc * per_channel <= budget_bytes:
            return tc
    return candidates[-1]


# --------------------------------------------------------------------------
# Pass 1: per-batch attention + trans_conv (no bias).  Refs (batch squeezed):
#   x_ref   : (C, N)        input slab for this batch element
#   wkv_ref : (C//4+C, C)   stacked [wq ; wv]
#   bv_ref  : (C, 1)        v_conv bias (column layout)
#   wt_ref  : (C, C)        trans_conv weight
#   y_ref   : (C, N) bf16   pre-BatchNorm output
# --------------------------------------------------------------------------
def _attn_trans_kernel(x_ref, wkv_ref, bv_ref, wt_ref, y_ref, *, cq, tq):
    x = x_ref[...]                                         # storage dtype
    wkv = wkv_ref[...]

    # Fused q/k + v projection: one MXU matmul, then static slices (f32 acc).
    kv = jnp.dot(wkv, x, preferred_element_type=jnp.float32)   # (cq+C, N) f32
    x_k = kv[:cq, :]                                        # (cq, N)
    x_v = kv[cq:, :] + bv_ref[...].astype(jnp.float32)      # (C, N)

    c, n = x_v.shape
    n_qt = n // tq

    # bf16 operands for the two O(N^2) MXU matmuls (accumulation stays f32).
    xk_b = x_k.astype(jnp.bfloat16)
    xv_b = x_v.astype(jnp.bfloat16)

    # Flash-style loop over query tiles: only a (tq, N) attention tile is live.
    acc = jnp.zeros((c, n), jnp.float32)        # x_v @ softmax (pre column-renorm)
    col_sum = jnp.zeros((1, n), jnp.float32)    # query-dim sums of softmax
    for qi in range(n_qt):
        qk = xk_b[:, qi * tq:(qi + 1) * tq]                  # (cq, tq)
        # energy tile (shared q/k weight => Gram matrix of x_k):
        #   e[i, m] = sum_q x_k[q, qi*tq+i] * x_k[q, m]
        e = jax.lax.dot_general(qk, xk_b, (((0,), (0,)), ((), ())),
                                preferred_element_type=jnp.float32)  # (tq, N)

        # softmax over keys (last dim); exp on bf16 inputs so p is already in
        # the MXU dtype (bf16 EUP on v6e/v7x; legalised on v5e).
        m = jnp.max(e, axis=-1, keepdims=True)
        p = jnp.exp((e - m).astype(jnp.bfloat16))            # (tq, N) bf16
        row_sum = jnp.sum(p.astype(jnp.float32), axis=-1, keepdims=True)
        inv_row = pl.reciprocal(row_sum, approx=True).astype(jnp.bfloat16)
        attn = p * inv_row                                   # (tq, N) bf16

        # Deferred dim=1 renorm: only carry the column sums (f32 accumulation).
        col_sum = col_sum + jnp.sum(attn.astype(jnp.float32), axis=0,
                                    keepdims=True)
        acc = acc + jnp.dot(xv_b[:, qi * tq:(qi + 1) * tq], attn,
                            preferred_element_type=jnp.float32)

    # Column scaling commutes with the contraction over queries -> apply once.
    x_r = acc * pl.reciprocal(1e-9 + col_sum, approx=True)      # (C, N) f32

    # trans_conv(x - x_r).  Bias intentionally dropped: a per-channel constant
    # is exactly cancelled by the training-mode BatchNorm mean subtraction.
    t = x.astype(jnp.float32) - x_r
    wt = wt_ref[...]
    y = jnp.dot(wt, t.astype(wt.dtype), preferred_element_type=jnp.float32)
    y_ref[...] = y.astype(y_ref.dtype)                           # bf16 writeback


# --------------------------------------------------------------------------
# Pass 2: BatchNorm1d (training-mode batch stats, one-pass sum / sumsq),
# affine, ReLU, residual add.  Grid over channel tiles (stats are per channel,
# so every tile sees the full batch -> exact full-batch statistics).
#   y_ref     : (B, TC, N) bf16  pre-BN activations
#   x_ref     : (B, TC, N)       residual input
#   gamma_ref : (TC, 1)          BN weight
#   beta_ref  : (TC, 1)          BN bias
#   out_ref   : (B, TC, N)
# --------------------------------------------------------------------------
def _bn_relu_res_kernel(y_ref, x_ref, gamma_ref, beta_ref, out_ref, *, count):
    y = y_ref[...].astype(jnp.float32)                       # (B, TC, N)
    inv_count = 1.0 / count
    s = jnp.sum(y, axis=(0, 2), keepdims=True)               # (1, TC, 1)
    ss = jnp.sum(y * y, axis=(0, 2), keepdims=True)
    mu = s * inv_count
    var = ss * inv_count - mu * mu                           # biased variance

    g = gamma_ref[...].astype(jnp.float32)[None, :, :]       # (1, TC, 1)
    b = beta_ref[...].astype(jnp.float32)[None, :, :]
    scale = jax.lax.rsqrt(var + BN_EPS) * g
    y_hat = (y - mu) * scale + b

    out_ref[...] = (x_ref[...].astype(jnp.float32)
                    + jnp.maximum(y_hat, 0.0)).astype(out_ref.dtype)


@jax.jit
def sa_layer(x, wq, wv, bv, wt, bt, gamma, beta):
    """Assumes q_conv.weight is tied to k_conv.weight (canonical PCT SA_Layer)
    and training-mode BatchNorm (bt cancels in the mean subtraction)."""
    del bt  # cancelled exactly by training-mode BN mean subtraction
    B, C, N = x.shape
    Cq = wq.shape[0]
    itemsize = x.dtype.itemsize
    y_itemsize = jnp.dtype(jnp.bfloat16).itemsize

    vmem_limit = _vmem_limit_bytes()
    tq = _choose_query_tile(N)

    wkv = jnp.concatenate([wq, wv], axis=0)                  # (Cq + C, C)
    bv_col = bv.reshape(C, 1)
    gamma_col = gamma.reshape(C, 1)
    beta_col = beta.reshape(C, 1)

    # ---------------- pass 1: attention + trans_conv, grid over batch -------
    flops1 = 2 * B * ((Cq + C) * C * N + Cq * N * N + C * N * N + C * C * N)
    bytes1 = (B * C * N * itemsize
              + ((Cq + C) * C + C + C * C) * itemsize
              + B * C * N * y_itemsize)
    y = pl.pallas_call(
        functools.partial(_attn_trans_kernel, cq=Cq, tq=tq),
        out_shape=jax.ShapeDtypeStruct((B, C, N), jnp.bfloat16),
        grid=(B,),
        in_specs=[
            pl.BlockSpec((None, C, N), lambda b: (b, 0, 0)),   # x (batch slab)
            pl.BlockSpec((Cq + C, C), lambda b: (0, 0)),       # stacked weight (resident)
            pl.BlockSpec((C, 1), lambda b: (0, 0)),            # bv (resident)
            pl.BlockSpec((C, C), lambda b: (0, 0)),            # wt (resident)
        ],
        out_specs=pl.BlockSpec((None, C, N), lambda b: (b, 0, 0)),
        compiler_params=pltpu.CompilerParams(
            dimension_semantics=("parallel",),        # >=2 units for v7x's 2 TCs when B>=2
            vmem_limit_bytes=vmem_limit),
        cost_estimate=pl.CostEstimate(
            flops=flops1,
            transcendentals=B * (N * N + 2 * N),
            bytes_accessed=bytes1),
    )(x, wkv, bv_col, wt)

    # ------------- pass 2: BN + ReLU + residual, grid over channel tiles ----
    tc = _choose_channel_tile(B, C, N, itemsize, y_itemsize, vmem_limit // 2)
    flops2 = 10 * B * C * N
    bytes2 = B * C * N * (y_itemsize + 2 * itemsize) + 2 * C * 4
    out = pl.pallas_call(
        functools.partial(_bn_relu_res_kernel, count=B * N),
        out_shape=jax.ShapeDtypeStruct((B, C, N), x.dtype),
        grid=(C // tc,),
        in_specs=[
            pl.BlockSpec((B, tc, N), lambda c: (0, c, 0)),     # y (bf16)
            pl.BlockSpec((B, tc, N), lambda c: (0, c, 0)),     # x (residual)
            pl.BlockSpec((tc, 1), lambda c: (c, 0)),           # gamma
            pl.BlockSpec((tc, 1), lambda c: (c, 0)),           # beta
        ],
        out_specs=pl.BlockSpec((B, tc, N), lambda c: (0, c, 0)),
        compiler_params=pltpu.CompilerParams(
            dimension_semantics=("parallel",),
            vmem_limit_bytes=vmem_limit),
        cost_estimate=pl.CostEstimate(
            flops=flops2, transcendentals=C, bytes_accessed=bytes2),
    )(y, x, gamma_col, beta_col)
    return out


def sa_layer_ref(x, wq, wv, bv, wt, bt, gamma, beta):
    """Pure-JAX reference mirroring the PyTorch forward (training-mode BN)."""
    x_q = jnp.einsum('qc,bcn->bnq', wq, x)
    x_k = jnp.einsum('qc,bcn->bqn', wq, x)
    x_v = jnp.einsum('dc,bcn->bdn', wv, x) + bv[0][None, :, None]
    energy = jnp.einsum('bnq,bqm->bnm', x_q, x_k)
    attention = jax.nn.softmax(energy, axis=-1)
    attention = attention / (1e-9 + attention.sum(axis=1, keepdims=True))
    x_r = jnp.einsum('bcn,bnm->bcm', x_v, attention)
    t = x - x_r
    y = jnp.einsum('dc,bcn->bdn', wt, t) + bt[0][None, :, None]
    mu = jnp.mean(y, axis=(0, 2), keepdims=True)
    var = jnp.mean((y - mu) ** 2, axis=(0, 2), keepdims=True)
    y_hat = (y - mu) / jnp.sqrt(var + BN_EPS)
    y_hat = y_hat * gamma[0][None, :, None] + beta[0][None, :, None]
    return x + jnp.maximum(y_hat, 0.0)


if __name__ == "__main__":
    B, C, N = 2, 32, 16          # batch, channels (divisible by 4), points
    Cq = C // 4

    key = jax.random.PRNGKey(0)
    ks = jax.random.split(key, 6)
    x = jax.random.normal(ks[0], (B, C, N), jnp.float32)
    wq = jax.random.normal(ks[1], (Cq, C), jnp.float32) * 0.1   # q_conv == k_conv weight (shared)
    wv = jax.random.normal(ks[2], (C, C), jnp.float32) * 0.1    # v_conv weight
    bv = jax.random.normal(ks[3], (1, C), jnp.float32) * 0.1    # v_conv bias
    wt = jax.random.normal(ks[4], (C, C), jnp.float32) * 0.1    # trans_conv weight
    bt = jax.random.normal(ks[5], (1, C), jnp.float32) * 0.1    # trans_conv bias
    gamma = jnp.ones((1, C), jnp.float32)                        # BN weight (default init)
    beta = jnp.zeros((1, C), jnp.float32)                        # BN bias (default init)

    out = sa_layer(x, wq, wv, bv, wt, bt, gamma, beta)
    out = jax.block_until_ready(out)

    ref = sa_layer_ref(x, wq, wv, bv, wt, bt, gamma, beta)
    assert out.shape == (B, C, N)
    # Tolerance relaxed vs exact f32: the kernel feeds bf16 operands to the two
    # O(N^2) MXU matmuls, evaluates the softmax exp on bf16 inputs, uses the
    # EUP approximate reciprocal for the softmax / column renormalisation,
    # stores the pre-BN intermediate in bf16, and uses a one-pass (sum, sumsq)
    # BatchNorm variance; BN's 1/std then amplifies those absolute errors.
    max_err = float(jnp.max(jnp.abs(out - ref)))
    assert jnp.allclose(out, ref, rtol=3e-2, atol=3e-2), (
        f"Pallas kernel mismatch vs JAX reference (max abs err = {max_err})")

    print("KERNEL_OK")
</pallas_src>

<mosaic_0001>
module attributes {stable_mosaic.version = 11 : i64} {
  func.func @_attn_trans_kernel(%arg0: i32, %arg1: memref<1x32x16xf32, #tpu.memory_space<vmem>>, %arg2: memref<40x32xf32, #tpu.memory_space<vmem>>, %arg3: memref<32x1xf32, #tpu.memory_space<vmem>>, %arg4: memref<32x32xf32, #tpu.memory_space<vmem>>, %arg5: memref<1x32x16xbf16, #tpu.memory_space<vmem>>) attributes {dimension_semantics = [#tpu.dimension_semantics<parallel>], iteration_bounds = array<i64: 2>, scalar_prefetch = 0 : i64, scratch_operands = 0 : i64, tpu.core_type = #tpu.core_type<tc>, window_params = [{transform_indices = @transform_0, window_bounds = array<i64: 1, 32, 16>}, {pipeline_mode = #tpu.pipeline_mode<synchronous>, transform_indices = @transform_1, window_bounds = array<i64: 40, 32>}, {pipeline_mode = #tpu.pipeline_mode<synchronous>, transform_indices = @transform_2, window_bounds = array<i64: 32, 1>}, {pipeline_mode = #tpu.pipeline_mode<synchronous>, transform_indices = @transform_3, window_bounds = array<i64: 32, 32>}, {transform_indices = @transform_4, window_bounds = array<i64: 1, 32, 16>}]} {
    %c0 = arith.constant 0 : index
    %c0_0 = arith.constant 0 : index
    %c0_1 = arith.constant 0 : index
    %0 = vector.load %arg1[%c0, %c0_0, %c0_1] : memref<1x32x16xf32, #tpu.memory_space<vmem>>, vector<1x32x16xf32>
    %1 = vector.shape_cast %0 : vector<1x32x16xf32> to vector<32x16xf32>
    %c0_2 = arith.constant 0 : index
    %c0_3 = arith.constant 0 : index
    %2 = vector.load %arg2[%c0_2, %c0_3] : memref<40x32xf32, #tpu.memory_space<vmem>>, vector<40x32xf32>
    %cst = arith.constant dense<0.000000e+00> : vector<40x16xf32>
    %3 = tpu.matmul %2, %1, %cst {dimension_numbers = #tpu.dot_dimension_numbers<[1], [0], [0], [1], [0, 0, 1, 1], [], []>} : vector<40x32xf32>, vector<32x16xf32>, vector<40x16xf32> -> vector<40x16xf32>
    %4 = vector.extract_strided_slice %3 {offsets = [0, 0], sizes = [8, 16], strides = [1, 1]} : vector<40x16xf32> to vector<8x16xf32>
    %5 = vector.extract_strided_slice %3 {offsets = [8, 0], sizes = [32, 16], strides = [1, 1]} : vector<40x16xf32> to vector<32x16xf32>
    %c0_4 = arith.constant 0 : index
    %c0_5 = arith.constant 0 : index
    %6 = vector.load %arg3[%c0_4, %c0_5] : memref<32x1xf32, #tpu.memory_space<vmem>>, vector<32x1xf32>
    %7 = vector.broadcast %6 : vector<32x1xf32> to vector<32x16xf32>
    %8 = arith.addf %5, %7 : vector<32x16xf32>
    %9 = arith.truncf %4 : vector<8x16xf32> to vector<8x16xbf16>
    %10 = arith.truncf %8 : vector<32x16xf32> to vector<32x16xbf16>
    %cst_6 = arith.constant 0.000000e+00 : f32
    %11 = vector.broadcast %cst_6 : f32 to vector<32x16xf32>
    %cst_7 = arith.constant 0.000000e+00 : f32
    %12 = vector.broadcast %cst_7 : f32 to vector<1x16xf32>
    %cst_8 = arith.constant dense<0.000000e+00> : vector<16x16xf32>
    %13 = tpu.matmul %9, %9, %cst_8 {dimension_numbers = #tpu.dot_dimension_numbers<[0], [0], [1], [1], [0, 1, 1, 1], [], []>} : vector<8x16xbf16>, vector<8x16xbf16>, vector<16x16xf32> -> vector<16x16xf32>
    %cst_9 = arith.constant dense<0xFF800000> : vector<16xf32>
    %14 = vector.multi_reduction <maximumf>, %13, %cst_9 [1] : vector<16x16xf32> to vector<16xf32>
    %15 = vector.shape_cast %14 : vector<16xf32> to vector<16x1xf32>
    %16 = vector.broadcast %15 : vector<16x1xf32> to vector<16x16xf32>
    %17 = arith.subf %13, %16 : vector<16x16xf32>
    %18 = arith.truncf %17 : vector<16x16xf32> to vector<16x16xbf16>
    %19 = math.exp %18 : vector<16x16xbf16>
    %20 = arith.extf %19 : vector<16x16xbf16> to vector<16x16xf32>
    %cst_10 = arith.constant dense<0.000000e+00> : vector<16xf32>
    %21 = vector.multi_reduction <add>, %20, %cst_10 [1] : vector<16x16xf32> to vector<16xf32>
    %22 = vector.shape_cast %21 : vector<16xf32> to vector<16x1xf32>
    %23 = tpu.reciprocal %22 {approx = true} : vector<16x1xf32> -> vector<16x1xf32>
    %24 = arith.truncf %23 : vector<16x1xf32> to vector<16x1xbf16>
    %25 = vector.broadcast %24 : vector<16x1xbf16> to vector<16x16xbf16>
    %26 = arith.mulf %19, %25 : vector<16x16xbf16>
    %27 = arith.extf %26 : vector<16x16xbf16> to vector<16x16xf32>
    %cst_11 = arith.constant dense<0.000000e+00> : vector<16xf32>
    %28 = vector.multi_reduction <add>, %27, %cst_11 [0] : vector<16x16xf32> to vector<16xf32>
    %29 = vector.shape_cast %28 : vector<16xf32> to vector<1x16xf32>
    %30 = arith.addf %12, %29 : vector<1x16xf32>
    %cst_12 = arith.constant dense<0.000000e+00> : vector<32x16xf32>
    %31 = tpu.matmul %10, %26, %cst_12 {dimension_numbers = #tpu.dot_dimension_numbers<[1], [0], [0], [1], [0, 0, 1, 1], [], []>} : vector<32x16xbf16>, vector<16x16xbf16>, vector<32x16xf32> -> vector<32x16xf32>
    %32 = arith.addf %11, %31 : vector<32x16xf32>
    %cst_13 = arith.constant 9.99999971E-10 : f32
    %33 = vector.broadcast %cst_13 : f32 to vector<1x16xf32>
    %34 = arith.addf %33, %30 : vector<1x16xf32>
    %35 = tpu.reciprocal %34 {approx = true} : vector<1x16xf32> -> vector<1x16xf32>
    %36 = vector.broadcast %35 : vector<1x16xf32> to vector<32x16xf32>
    %37 = arith.mulf %32, %36 : vector<32x16xf32>
    %38 = arith.subf %1, %37 : vector<32x16xf32>
    %c0_14 = arith.constant 0 : index
    %c0_15 = arith.constant 0 : index
    %39 = vector.load %arg4[%c0_14, %c0_15] : memref<32x32xf32, #tpu.memory_space<vmem>>, vector<32x32xf32>
    %cst_16 = arith.constant dense<0.000000e+00> : vector<32x16xf32>
    %40 = tpu.matmul %39, %38, %cst_16 {dimension_numbers = #tpu.dot_dimension_numbers<[1], [0], [0], [1], [0, 0, 1, 1], [], []>} : vector<32x32xf32>, vector<32x16xf32>, vector<32x16xf32> -> vector<32x16xf32>
    %41 = arith.truncf %40 : vector<32x16xf32> to vector<32x16xbf16>
    %c0_17 = arith.constant 0 : index
    %c0_18 = arith.constant 0 : index
    %c0_19 = arith.constant 0 : index
    %42 = vector.load %arg5[%c0_17, %c0_18, %c0_19] : memref<1x32x16xbf16, #tpu.memory_space<vmem>>, vector<1x32x16xbf16>
    %43 = vector.shape_cast %42 : vector<1x32x16xbf16> to vector<32x16xbf16>
    %44 = vector.shape_cast %41 : vector<32x16xbf16> to vector<1x32x16xbf16>
    tpu.vector_store %arg5[%c0_17, %c0_18, %c0_19], %44 {strides = array<i32>} : memref<1x32x16xbf16, #tpu.memory_space<vmem>>, vector<1x32x16xbf16>,
    return
  }
  func.func @transform_0(%arg0: i32) -> (i32, i32, i32) {
    %c0_i32 = arith.constant 0 : i32
    %c0_i32_0 = arith.constant 0 : i32
    %c0_i32_1 = arith.constant 0 : i32
    return %arg0, %c0_i32, %c0_i32_0 : i32, i32, i32
  }
  func.func @transform_1(%arg0: i32) -> (i32, i32) {
    %c0_i32 = arith.constant 0 : i32
    %c0_i32_0 = arith.constant 0 : i32
    %c0_i32_1 = arith.constant 0 : i32
    return %c0_i32, %c0_i32_0 : i32, i32
  }
  func.func @transform_2(%arg0: i32) -> (i32, i32) {
    %c0_i32 = arith.constant 0 : i32
    %c0_i32_0 = arith.constant 0 : i32
    %c0_i32_1 = arith.constant 0 : i32
    return %c0_i32, %c0_i32_0 : i32, i32
  }
  func.func @transform_3(%arg0: i32) -> (i32, i32) {
    %c0_i32 = arith.constant 0 : i32
    %c0_i32_0 = arith.constant 0 : i32
    %c0_i32_1 = arith.constant 0 : i32
    return %c0_i32, %c0_i32_0 : i32, i32
  }
  func.func @transform_4(%arg0: i32) -> (i32, i32, i32) {
    %c0_i32 = arith.constant 0 : i32
    %c0_i32_0 = arith.constant 0 : i32
    %c0_i32_1 = arith.constant 0 : i32
    return %arg0, %c0_i32, %c0_i32_0 : i32, i32, i32
  }
}

module attributes {stable_mosaic.version = 11 : i64} {
  func.func @_bn_relu_res_kernel(%arg0: i32, %arg1: memref<2x32x16xbf16, #tpu.memory_space<vmem>>, %arg2: memref<2x32x16xf32, #tpu.memory_space<vmem>>, %arg3: memref<32x1xf32, #tpu.memory_space<vmem>>, %arg4: memref<32x1xf32, #tpu.memory_space<vmem>>, %arg5: memref<2x32x16xf32, #tpu.memory_space<vmem>>) attributes {dimension_semantics = [#tpu.dimension_semantics<parallel>], iteration_bounds = array<i64: 1>, scalar_prefetch = 0 : i64, scratch_operands = 0 : i64, tpu.core_type = #tpu.core_type<tc>, window_params = [{transform_indices = @transform_0, window_bounds = array<i64: 2, 32, 16>}, {transform_indices = @transform_1, window_bounds = array<i64: 2, 32, 16>}, {transform_indices = @transform_2, window_bounds = array<i64: 32, 1>}, {transform_indices = @transform_3, window_bounds = array<i64: 32, 1>}, {transform_indices = @transform_4, window_bounds = array<i64: 2, 32, 16>}]} {
    %c0 = arith.constant 0 : index
    %c0_0 = arith.constant 0 : index
    %c0_1 = arith.constant 0 : index
    %0 = vector.load %arg1[%c0, %c0_0, %c0_1] : memref<2x32x16xbf16, #tpu.memory_space<vmem>>, vector<2x32x16xbf16>
    %1 = arith.extf %0 : vector<2x32x16xbf16> to vector<2x32x16xf32>
    %cst = arith.constant dense<0.000000e+00> : vector<32xf32>
    %2 = vector.multi_reduction <add>, %1, %cst [0, 2] : vector<2x32x16xf32> to vector<32xf32>
    %3 = vector.shape_cast %2 : vector<32xf32> to vector<1x32x1xf32>
    %4 = arith.mulf %1, %1 : vector<2x32x16xf32>
    %cst_2 = arith.constant dense<0.000000e+00> : vector<32xf32>
    %5 = vector.multi_reduction <add>, %4, %cst_2 [0, 2] : vector<2x32x16xf32> to vector<32xf32>
    %6 = vector.shape_cast %5 : vector<32xf32> to vector<1x32x1xf32>
    %cst_3 = arith.constant 3.125000e-02 : f32
    %7 = vector.broadcast %cst_3 : f32 to vector<1x32x1xf32>
    %8 = arith.mulf %3, %7 : vector<1x32x1xf32>
    %cst_4 = arith.constant 3.125000e-02 : f32
    %9 = vector.broadcast %cst_4 : f32 to vector<1x32x1xf32>
    %10 = arith.mulf %6, %9 : vector<1x32x1xf32>
    %11 = arith.mulf %8, %8 : vector<1x32x1xf32>
    %12 = arith.subf %10, %11 : vector<1x32x1xf32>
    %c0_5 = arith.constant 0 : index
    %c0_6 = arith.constant 0 : index
    %13 = vector.load %arg3[%c0_5, %c0_6] : memref<32x1xf32, #tpu.memory_space<vmem>>, vector<32x1xf32>
    %14 = vector.shape_cast %13 : vector<32x1xf32> to vector<1x32x1xf32>
    %c0_7 = arith.constant 0 : index
    %c0_8 = arith.constant 0 : index
    %15 = vector.load %arg4[%c0_7, %c0_8] : memref<32x1xf32, #tpu.memory_space<vmem>>, vector<32x1xf32>
    %16 = vector.shape_cast %15 : vector<32x1xf32> to vector<1x32x1xf32>
    %cst_9 = arith.constant 9.99999974E-6 : f32
    %17 = vector.broadcast %cst_9 : f32 to vector<1x32x1xf32>
    %18 = arith.addf %12, %17 : vector<1x32x1xf32>
    %19 = math.rsqrt %18 : vector<1x32x1xf32>
    %20 = arith.mulf %19, %14 : vector<1x32x1xf32>
    %21 = vector.broadcast %8 : vector<1x32x1xf32> to vector<2x32x16xf32>
    %22 = arith.subf %1, %21 : vector<2x32x16xf32>
    %23 = vector.broadcast %20 : vector<1x32x1xf32> to vector<2x32x16xf32>
    %24 = arith.mulf %22, %23 : vector<2x32x16xf32>
    %25 = vector.broadcast %16 : vector<1x32x1xf32> to vector<2x32x16xf32>
    %26 = arith.addf %24, %25 : vector<2x32x16xf32>
    %c0_10 = arith.constant 0 : index
    %c0_11 = arith.constant 0 : index
    %c0_12 = arith.constant 0 : index
    %27 = vector.load %arg2[%c0_10, %c0_11, %c0_12] : memref<2x32x16xf32, #tpu.memory_space<vmem>>, vector<2x32x16xf32>
    %cst_13 = arith.constant 0.000000e+00 : f32
    %28 = vector.broadcast %cst_13 : f32 to vector<2x32x16xf32>
    %29 = arith.maximumf %26, %28 : vector<2x32x16xf32>
    %30 = arith.addf %27, %29 : vector<2x32x16xf32>
    %c0_14 = arith.constant 0 : index
    %c0_15 = arith.constant 0 : index
    %c0_16 = arith.constant 0 : index
    %31 = vector.load %arg5[%c0_14, %c0_15, %c0_16] : memref<2x32x16xf32, #tpu.memory_space<vmem>>, vector<2x32x16xf32>
    tpu.vector_store %arg5[%c0_14, %c0_15, %c0_16], %30 {strides = array<i32>} : memref<2x32x16xf32, #tpu.memory_space<vmem>>, vector<2x32x16xf32>,
    return
  }
  func.func @transform_0(%arg0: i32) -> (i32, i32, i32) {
    %c0_i32 = arith.constant 0 : i32
    %c0_i32_0 = arith.constant 0 : i32
    %c0_i32_1 = arith.constant 0 : i32
    return %c0_i32, %arg0, %c0_i32_0 : i32, i32, i32
  }
  func.func @transform_1(%arg0: i32) -> (i32, i32, i32) {
    %c0_i32 = arith.constant 0 : i32
    %c0_i32_0 = arith.constant 0 : i32
    %c0_i32_1 = arith.constant 0 : i32
    return %c0_i32, %arg0, %c0_i32_0 : i32, i32, i32
  }
  func.func @transform_2(%arg0: i32) -> (i32, i32) {
    %c0_i32 = arith.constant 0 : i32
    %c0_i32_0 = arith.constant 0 : i32
    return %arg0, %c0_i32 : i32, i32
  }
  func.func @transform_3(%arg0: i32) -> (i32, i32) {
    %c0_i32 = arith.constant 0 : i32
    %c0_i32_0 = arith.constant 0 : i32
    return %arg0, %c0_i32 : i32, i32
  }
  func.func @transform_4(%arg0: i32) -> (i32, i32, i32) {
    %c0_i32 = arith.constant 0 : i32
    %c0_i32_0 = arith.constant 0 : i32
    %c0_i32_1 = arith.constant 0 : i32
    return %c0_i32, %arg0, %c0_i32_0 : i32, i32, i32
  }
}

</mosaic_0001>

<llo_original>
// kernel: sa_layer.2
$region0: #{sa_layer.2}
  #allocation0 [shape = 'u32[]', space=smem, size = 0x4, offset = 0x4, fixed_abs, tag = 'smem constant byte address 0x4 - core index']
  #allocation1 [shape = 'u32[144,128]{1,0:T(1,128)}', space=vmem, size = 0x12000, scoped, tag = 'internal scratch']
  %s0 = inlined_call_operand.hbm [shape: f32[2,32,16], index: 0, kind: input, shape index: {}]
  %s1 = inlined_call_operand.hbm [shape: f32[40,32], index: 1, kind: input, shape index: {}]
  %s2 = inlined_call_operand.hbm [shape: f32[32,1], index: 2, kind: input, shape index: {}]
  %s3 = inlined_call_operand.hbm [shape: f32[32,32], index: 3, kind: input, shape index: {}]
  %s4 = inlined_call_operand.hbm [shape: bf16[2,32,16], index: 4, kind: output, shape index: {}]
  %s5 = sld [smem:[#allocation0]]
  $region65: #{sa_layer.2} parent=0
    _
  %s7 = ssub.s32 1, %s5
  %s8 = scalar_select 0, %s7, %s5
  $region1: #{sa_layer.2} parent=0
    #allocation2 [shape = 'u8[32768]{0}', space=vmem, size = 0x8000, scoped, tag = 'input window, operand 0']
    #allocation3 [shape = 's32[2]{0}', space=sflag, size = 0x8, scoped, tag = 'scoped memory for sa_layer.2']
    #allocation4 [shape = 's32[2]{0}', space=sflag, size = 0x8, scoped, tag = 'scoped memory for sa_layer.2']
    #allocation5 [shape = 'u8[20480]{0}', space=vmem, size = 0x5000, scoped, tag = 'input window, operand 1, single buffered']
    #allocation6 [shape = 's32[1]{0}', space=sflag, size = 0x4, scoped, tag = 'scoped memory for sa_layer.2']
    #allocation7 [shape = 'u8[16384]{0}', space=vmem, size = 0x4000, scoped, tag = 'input window, operand 2, single buffered']
    #allocation8 [shape = 'u8[16384]{0}', space=vmem, size = 0x4000, scoped, tag = 'input window, operand 3, single buffered']
    #allocation9 [shape = 's32[1]{0}', space=sflag, size = 0x4, scoped, tag = 'scoped memory for sa_layer.2']
    #allocation10 [shape = 'u8[16384]{0}', space=vmem, size = 0x4000, scoped, tag = 'output window, operand 0']
    %9 = vsyncpa [#allocation3], 0
    %s10 = scalar_lea.sflag [#allocation3], 1
    %11 = vsyncpa %s10, 0
    %12 = vsyncpa [#allocation6], 0
    %13 = vsyncpa [#allocation9], 0
    %14 = vsyncpa [#allocation4], 0
    %s15 = scalar_lea.sflag [#allocation4], 1
    %16 = vsyncpa %s15, 0
    loop: start=0, step=1, limit=4
    $region2: #{sa_layer.2} parent=1 // loop_pre_header
      _
    $region3: #{sa_layer.2} parent=1 // loop_header
      %s18 = sphi 0, %s22
      %p19 = scmp.ge.s32.totalorder %s18, 4
      %s28 = sphi 0, %s30
      %s31 = sphi 0, %s28
      %s32 = sphi 0, %s31
      %s48 = sphi 0, %s32
      %s52 = sphi 0, %s52
      %s54 = sphi 0, %s52
      %s55 = sphi 0, %s54
      %s69 = sphi 0, %s55
      %s73 = sphi 0, %s73
      %s75 = sphi 0, %s73
      %s76 = sphi 0, %s75
      %s90 = sphi 0, %s76
      %s94 = sphi 0, %s94
      %s96 = sphi 0, %s94
      %s97 = sphi 0, %s96
      %s111 = sphi 0, %s97
      %s117 = sphi 0, %s119
      %s120 = sphi 0, %s117
      %s121 = sphi 0, %s120
      %s137 = sphi 0, %s121
    $region4: #{sa_layer.2} parent=1 // loop_header_branch
      %21 = sbr.rel (%p19) target = $region8
    $region5: #{sa_layer.2} parent=1 // loop_body
      %s23 = ssub.s32 %s18, 1
      %s24 = ssub.s32 %s18, 2
      %s25 = sadd.s32 %s18, 1
      %s26 = ssub.s32 %s18, %s25
      %p27 = scmp.eq.s32.totalorder %s26, 0
      %s29 = sadd.s32 %s28, 1
      %s30 = scalar_select %p27, %s28, %s29
      %p33 = pneg %p27
      %p34 = scmp.eq.s32.totalorder %s18, 1
      %p35 = por %p33, %p34
      %p36 = scmp.ne.s32.totalorder %s28, %s31
      %p37 = scmp.eq.s32.totalorder %s18, 0
      %p38 = por %p36, %p37
      %p39 = scmp.ne.s32.totalorder %s28, %s31
      %p40 = scmp.eq.s32.totalorder %s23, 1
      %p41 = por %p39, %p40
      %p42 = scmp.ne.s32.totalorder %s31, %s32
      %p43 = scmp.eq.s32.totalorder %s23, 0
      %p44 = por %p42, %p43
      %p45 = scmp.ne.s32.totalorder %s31, %s32
      %p46 = scmp.eq.s32.totalorder %s24, 1
      %p47 = por %p45, %p46
      %p49 = scmp.ne.s32.totalorder %s32, %s48
      %p50 = scmp.eq.s32.totalorder %s24, 0
      %p51 = por %p49, %p50
      %s53 = sadd.s32 %s52, 1
      %p56 = scmp.eq.s32.totalorder %s18, 1
      %p57 = scmp.ne.s32.totalorder %s52, %s54
      %p58 = scmp.eq.s32.totalorder %s18, 0
      %p59 = por %p57, %p58
      %p60 = scmp.ne.s32.totalorder %s52, %s54
      %p61 = scmp.eq.s32.totalorder %s23, 1
      %p62 = por %p60, %p61
      %p63 = scmp.ne.s32.totalorder %s54, %s55
      %p64 = scmp.eq.s32.totalorder %s23, 0
      %p65 = por %p63, %p64
      %p66 = scmp.ne.s32.totalorder %s54, %s55
      %p67 = scmp.eq.s32.totalorder %s24, 1
      %p68 = por %p66, %p67
      %p70 = scmp.ne.s32.totalorder %s55, %s69
      %p71 = scmp.eq.s32.totalorder %s24, 0
      %p72 = por %p70, %p71
      %s74 = sadd.s32 %s73, 1
      %p77 = scmp.eq.s32.totalorder %s18, 1
      %p78 = scmp.ne.s32.totalorder %s73, %s75
      %p79 = scmp.eq.s32.totalorder %s18, 0
      %p80 = por %p78, %p79
      %p81 = scmp.ne.s32.totalorder %s73, %s75
      %p82 = scmp.eq.s32.totalorder %s23, 1
      %p83 = por %p81, %p82
      %p84 = scmp.ne.s32.totalorder %s75, %s76
      %p85 = scmp.eq.s32.totalorder %s23, 0
      %p86 = por %p84, %p85
      %p87 = scmp.ne.s32.totalorder %s75, %s76
      %p88 = scmp.eq.s32.totalorder %s24, 1
      %p89 = por %p87, %p88
      %p91 = scmp.ne.s32.totalorder %s76, %s90
      %p92 = scmp.eq.s32.totalorder %s24, 0
      %p93 = por %p91, %p92
      %s95 = sadd.s32 %s94, 1
      %p98 = scmp.eq.s32.totalorder %s18, 1
      %p99 = scmp.ne.s32.totalorder %s94, %s96
      %p100 = scmp.eq.s32.totalorder %s18, 0
      %p101 = por %p99, %p100
      %p102 = scmp.ne.s32.totalorder %s94, %s96
      %p103 = scmp.eq.s32.totalorder %s23, 1
      %p104 = por %p102, %p103
      %p105 = scmp.ne.s32.totalorder %s96, %s97
      %p106 = scmp.eq.s32.totalorder %s23, 0
      %p107 = por %p105, %p106
      %p108 = scmp.ne.s32.totalorder %s96, %s97
      %p109 = scmp.eq.s32.totalorder %s24, 1
      %p110 = por %p108, %p109
      %p112 = scmp.ne.s32.totalorder %s97, %s111
      %p113 = scmp.eq.s32.totalorder %s24, 0
      %p114 = por %p112, %p113
      %s115 = ssub.s32 %s18, %s25
      %p116 = scmp.eq.s32.totalorder %s115, 0
      %s118 = sadd.s32 %s117, 1
      %s119 = scalar_select %p116, %s117, %s118
      %p122 = pneg %p116
      %p123 = scmp.eq.s32.totalorder %s18, 1
      %p124 = por %p122, %p123
      %p125 = scmp.ne.s32.totalorder %s117, %s120
      %p126 = scmp.eq.s32.totalorder %s18, 0
      %p127 = por %p125, %p126
      %p128 = scmp.ne.s32.totalorder %s117, %s120
      %p129 = scmp.eq.s32.totalorder %s23, 1
      %p130 = por %p128, %p129
      %p131 = scmp.ne.s32.totalorder %s120, %s121
      %p132 = scmp.eq.s32.totalorder %s23, 0
      %p133 = por %p131, %p132
      %p134 = scmp.ne.s32.totalorder %s120, %s121
      %p135 = scmp.eq.s32.totalorder %s24, 1
      %p136 = por %p134, %p135
      %p138 = scmp.ne.s32.totalorder %s121, %s137
      %p139 = scmp.eq.s32.totalorder %s24, 0
      %p140 = por %p138, %p139
      %p141 = scmp.le.s32.totalorder 1, %s18
      %p142 = scmp.lt.s32.totalorder %s18, 3
      %p143 = pnand %p141, %p142
      %p144 = pneg %p143
      // Predicated region
      $region9: #{sa_layer.2} parent=5 // pred_check
        _
      $region10: #{sa_layer.2} parent=5 // pred_check_branch
        %146 = sbr.rel (%p143) target = $region12
      $region11: #{sa_layer.2} parent=5 // pred_region
        %s147 = ssub.s32 %s18, 1
        // Predicated region
        $region13: #{sa_layer.2} parent=11 // pred_check
          %p148 = pneg %p65
        $region14: #{sa_layer.2} parent=11 // pred_check_branch
          %150 = sbr.rel (%p148) target = $region16
        $region15: #{sa_layer.2} parent=11 // pred_region
          %s152 = ssub.s32 640, 640
          %153 = vsyncadd [#allocation6], %s152
          %s154 = sshll.u32 [#allocation5], 4
          %s155 = int_to_ptr.vmem [resolvable:$true] %s154
          %160 = dma.hbm_to_vmem [thread:$0]  %s1, 640, %s155, [#allocation6], 128, 128, 8
        $region16: #{sa_layer.2} parent=11 // pred_fallthru
          _
        // Predicated region
        $region17: #{sa_layer.2} parent=11 // pred_check
          %p161 = pneg %p86
        $region18: #{sa_layer.2} parent=11 // pred_check_branch
          %163 = sbr.rel (%p161) target = $region20
        $region19: #{sa_layer.2} parent=11 // pred_region
          %s165 = ssub.s32 512, 512
          %166 = vsyncadd [#allocation6], %s165
          %s167 = sshll.u32 [#allocation7], 4
          %s168 = int_to_ptr.vmem [resolvable:$true] %s167
          %173 = dma.hbm_to_vmem [thread:$0]  %s2, 512, %s168, [#allocation6], 128, 128, 8
        $region20: #{sa_layer.2} parent=11 // pred_fallthru
          _
        // Predicated region
        $region21: #{sa_layer.2} parent=11 // pred_check
          %p174 = pneg %p107
        $region22: #{sa_layer.2} parent=11 // pred_check_branch
          %176 = sbr.rel (%p174) target = $region24
        $region23: #{sa_layer.2} parent=11 // pred_region
          %s178 = ssub.s32 512, 512
          %179 = vsyncadd [#allocation9], %s178
          %s180 = sshll.u32 [#allocation8], 4
          %s181 = int_to_ptr.vmem [resolvable:$true] %s180
          %186 = dma.hbm_to_vmem [thread:$0]  %s3, 512, %s181, [#allocation9], 128, 128, 8
        $region24: #{sa_layer.2} parent=11 // pred_fallthru
          _
      $region12: #{sa_layer.2} parent=5 // pred_fallthru
        _
      %p187 = scmp.lt.s32.totalorder %s18, 2
      // Predicated region
      $region25: #{sa_layer.2} parent=5 // pred_check
        %p188 = pneg %p187
      $region26: #{sa_layer.2} parent=5 // pred_check_branch
        %190 = sbr.rel (%p188) target = $region28
      $region27: #{sa_layer.2} parent=5 // pred_region
        // Predicated region
        $region29: #{sa_layer.2} parent=27 // pred_check
          %p191 = pneg %p38
        $region30: #{sa_layer.2} parent=27 // pred_check_branch
          %193 = sbr.rel (%p191) target = $region32
        $region31: #{sa_layer.2} parent=27 // pred_region
          %s194 = sand.u32 %s28, 1
          %s195 = scalar_lea.sflag [#allocation3], %s194
          %s196 = sand.u32 %s28, 1
          %s197 = smul.addr %s196, 32
          %s198 = scalar_lea.vmem [#allocation2], %s197
          %s200 = ssub.s32 512, 512
          %201 = vsyncadd %s195, %s200
          %s202 = smul.addr %s18, 4
          %s203 = smul.addr %s202, 128
          %s204 = scalar_lea.hbm %s0, %s203
          %s205 = sshll.u32 %s198, 4
          %s206 = int_to_ptr.vmem [resolvable:$true] %s205
          %211 = dma.hbm_to_vmem [thread:$0]  %s204, 512, %s206, %s195, 128, 128, 8
        $region32: #{sa_layer.2} parent=27 // pred_fallthru
          _
      $region28: #{sa_layer.2} parent=5 // pred_fallthru
        _
      %p212 = scmp.le.s32.totalorder 1, %s18
      %p213 = scmp.lt.s32.totalorder %s18, 3
      %p214 = pnand %p212, %p213
      %p215 = pneg %p214
      // Predicated region
      $region33: #{sa_layer.2} parent=5 // pred_check
        _
      $region34: #{sa_layer.2} parent=5 // pred_check_branch
        %217 = sbr.rel (%p214) target = $region36
      $region35: #{sa_layer.2} parent=5 // pred_region
        %s218 = ssub.s32 %s18, 1
        %s219 = sand.u32 %s31, 1
        %s220 = scalar_lea.sflag [#allocation3], %s219
        %s221 = sand.u32 %s31, 1
        %s222 = smul.addr %s221, 32
        %s223 = scalar_lea.vmem [#allocation2], %s222
        // Predicated region
        $region37: #{sa_layer.2} parent=35 // pred_check
          %p224 = pneg %p44
        $region38: #{sa_layer.2} parent=35 // pred_check_branch
          %226 = sbr.rel (%p224) target = $region40
        $region39: #{sa_layer.2} parent=35 // pred_region
          %227 = dma.done %s220, 512
        $region40: #{sa_layer.2} parent=35 // pred_fallthru
          _
        // Predicated region
        $region41: #{sa_layer.2} parent=35 // pred_check
          %p228 = pneg %p65
        $region42: #{sa_layer.2} parent=35 // pred_check_branch
          %230 = sbr.rel (%p228) target = $region44
        $region43: #{sa_layer.2} parent=35 // pred_region
          %231 = dma.done [#allocation6], 640
        $region44: #{sa_layer.2} parent=35 // pred_fallthru
          _
        // Predicated region
        $region45: #{sa_layer.2} parent=35 // pred_check
          %p232 = pneg %p86
        $region46: #{sa_layer.2} parent=35 // pred_check_branch
          %234 = sbr.rel (%p232) target = $region48
        $region47: #{sa_layer.2} parent=35 // pred_region
          %235 = dma.done [#allocation6], 512
        $region48: #{sa_layer.2} parent=35 // pred_fallthru
          _
        // Predicated region
        $region49: #{sa_layer.2} parent=35 // pred_check
          %p236 = pneg %p107
        $region50: #{sa_layer.2} parent=35 // pred_check_branch
          %238 = sbr.rel (%p236) target = $region52
        $region51: #{sa_layer.2} parent=35 // pred_region
          %239 = dma.done [#allocation9], 512
        $region52: #{sa_layer.2} parent=35 // pred_fallthru
          _
        %s240 = sand.u32 %s31, 1
        %s241 = scalar_lea.sflag [#allocation3], %s240
        %s242 = sand.u32 %s31, 1
        %s243 = smul.addr %s242, 32
        %s244 = scalar_lea.vmem [#allocation2], %s243
        %p245 = pneg %p44
        %p246 = pneg %p41
        %p247 = pneg %p65
        %p248 = pneg %p62
        %p249 = pneg %p86
        %p250 = pneg %p83
        %p251 = pneg %p107
        %p252 = pneg %p104
        %p253 = pneg %p133
        %p254 = pneg %p130
        %s255 = sand.u32 %s120, 1
        %s256 = scalar_lea.sflag [#allocation4], %s255
        %s257 = sand.u32 %s120, 1
        %s258 = smul.addr %s257, 16
        %s259 = scalar_lea.vmem [#allocation10], %s258
        %v261 = vld [vmem:[%s223] sm:$0xff]
        %v262 = vld [vmem:[%s223 + $0x8] sm:$0xff]
        %v263 = vld [vmem:[%s223 + $0x10] sm:$0xff]
        %v264 = vld [vmem:[%s223 + $0x18] sm:$0xff]
        %v265 = vld [vmem:[#allocation5] sm:$0xff]
        %v266 = vld [vmem:[#allocation5 + $0x8] sm:$0xff]
        %v267 = vld [vmem:[#allocation5 + $0x10] sm:$0xff]
        %v268 = vld [vmem:[#allocation5 + $0x18] sm:$0xff]
        %v269 = vld [vmem:[#allocation5 + $0x20] sm:$0xff]
        %vm270 = vcmask 261120
        %v272 = vsel %vm270, %v265, 0
        %v275 = vsel %vm270, %v266, 0
        %v278 = vsel %vm270, %v267, 0
        %v281 = vsel %vm270, %v268, 0
        %v284 = vsel %vm270, %v269, 0
        %286 = vmatprep.subr.mxu0 0.0
        %287 = vmatpush1.msra.mxu0 %v261
        %288 = vmatprep.subr.mxu0 0.0
        %289 = vmatpush1.msra.mxu0 %v262
        %290 = vmatprep.subr.mxu0 0.0
        %291 = vmatpush1.msra.mxu0 %v263
        %292 = vmatprep.subr.mxu0 0.0
        %293 = vmatpush1.msra.mxu0 %v264
        %294 = vmatprep.subr.mxu0 0.0
        %295 = vmatpush1.msra.mxu0 0.0
        %296 = vmatprep.subr.mxu0 0.0
        %297 = vmatpush1.msra.mxu0 0.0
        %298 = vmatprep.subr.mxu0 0.0
        %299 = vmatpush1.msra.mxu0 0.0
        %300 = vmatprep.subr.mxu0 0.0
        %301 = vmatpush1.msra.mxu0 0.0
        %302 = vmatprep.subr.mxu0 0.0
        %303 = vmatpush1.msra.mxu0 0.0
        %304 = vmatprep.subr.mxu0 0.0
        %305 = vmatpush1.msra.mxu0 0.0
        %306 = vmatprep.subr.mxu0 0.0
        %307 = vmatpush1.msra.mxu0 0.0
        %308 = vmatprep.subr.mxu0 0.0
        %309 = vmatpush1.msra.mxu0 0.0
        %310 = vmatprep.subr.mxu0 0.0
        %311 = vmatpush1.msra.mxu0 0.0
        %312 = vmatprep.subr.mxu0 0.0
        %313 = vmatpush1.msra.mxu0 0.0
        %314 = vmatprep.subr.mxu0 0.0
        %315 = vmatpush1.msra.mxu0 0.0
        %316 = vmatprep.subr.mxu0 0.0
        %317 = vmatpush1.msra.mxu0 0.0
        %318 = vmatprep.subr.mxu0 0.0
        %319 = vmatpush1.msra.mxu0 0.0
        %320 = vmatprep.subr.mxu0 0.0
        %321 = vmatpush1.msra.mxu0 0.0
        %322 = vmatprep.subr.mxu0 0.0
        %323 = vmatpush1.msra.mxu0 0.0
        %324 = vmatprep.subr.mxu0 0.0
        %325 = vmatpush1.msra.mxu0 0.0
        %326 = vmatprep.subr.mxu0 0.0
        %327 = vmatpush1.msra.mxu0 0.0
        %328 = vmatprep.subr.mxu0 0.0
        %329 = vmatpush1.msra.mxu0 0.0
        %330 = vmatprep.subr.mxu0 0.0
        %331 = vmatpush1.msra.mxu0 0.0
        %332 = vmatprep.subr.mxu0 0.0
        %333 = vmatpush1.msra.mxu0 0.0
        %334 = vmatprep.subr.mxu0 0.0
        %335 = vmatpush1.msra.mxu0 0.0
        %336 = vmatprep.subr.mxu0 0.0
        %337 = vmatpush1.msra.mxu0 0.0
        %338 = vmatprep.subr.mxu0 0.0
        %339 = vmatpush1.msra.mxu0 0.0
        %340 = vmatprep.subr.mxu0 0.0
        %341 = vmatpush1.msra.mxu0 0.0
        %342 = vmatprep.subr.mxu0 0.0
        %343 = vmatpush1.msra.mxu0 0.0
        %344 = vmatprep.subr.mxu0 0.0
        %345 = vmatpush1.msra.mxu0 0.0
        %346 = vmatprep.subr.mxu0 0.0
        %347 = vmatpush1.msra.mxu0 0.0
        %348 = vmatprep.subr.mxu0 0.0
        %349 = vmatpush1.msra.mxu0 0.0
        %350 = vmatprep.mubr.f32.mxu0 0.0
        %351 = vmatmul.mubr.f32.gmra.mrb[0].mxu0 %v272
        %v352 = vpop.f32.mrb[0].mxu0
        %v353 = vadd.f32 0.0, %v352
        %v354 = vpop.f32.mrb[0].mxu0
        %355 = vmatprep.mubr.f32.mxu0 0.0
        %356 = vmatmul.mubr.f32.gmra.mrb[0].mxu0 %v275
        %v357 = vpop.f32.mrb[0].mxu0
        %v358 = vadd.f32 0.0, %v357
        %v359 = vpop.f32.mrb[0].mxu0
        %360 = vmatprep.mubr.f32.mxu0 0.0
        %361 = vmatmul.mubr.f32.gmra.mrb[0].mxu0 %v278
        %v362 = vpop.f32.mrb[0].mxu0
        %v363 = vadd.f32 0.0, %v362
        %v364 = vpop.f32.mrb[0].mxu0
        %365 = vmatprep.mubr.f32.mxu0 0.0
        %366 = vmatmul.mubr.f32.gmra.mrb[0].mxu0 %v281
        %v367 = vpop.f32.mrb[0].mxu0
        %v368 = vadd.f32 0.0, %v367
        %v369 = vpop.f32.mrb[0].mxu0
        %370 = vmatprep.mubr.f32.mxu0 0.0
        %371 = vmatmul.mubr.f32.gmra.mrb[0].mxu0 %v284
        %v372 = vpop.f32.mrb[0].mxu0
        %v373 = vadd.f32 0.0, %v372
        %v374 = vpop.f32.mrb[0].mxu0
        %375 = vdwg.mxu0
        %v376 = vld [vmem:[#allocation7] sm:$0xff]
        %v377 = vld [vmem:[#allocation7 + $0x8] sm:$0xff]
        %v378 = vld [vmem:[#allocation7 + $0x10] sm:$0xff]
        %v379 = vld [vmem:[#allocation7 + $0x18] sm:$0xff]
        %381 = vset.pattern.permute.xlu0 0
        %382 = vperm.xlu0 %381, %v376
        %v383 = vpop.permute.xlu0 %382
        %386 = vset.pattern.permute.xlu0 0
        %387 = vperm.xlu0 %386, %v377
        %v388 = vpop.permute.xlu0 %387
        %391 = vset.pattern.permute.xlu0 0
        %392 = vperm.xlu0 %391, %v378
        %v393 = vpop.permute.xlu0 %392
        %396 = vset.pattern.permute.xlu0 0
        %397 = vperm.xlu0 %396, %v379
        %v398 = vpop.permute.xlu0 %397
        %v400 = vadd.f32 %v358, %v383
        %v401 = vadd.f32 %v363, %v388
        %v402 = vadd.f32 %v368, %v393
        %v403 = vadd.f32 %v373, %v398
        %v404 = vpack.c.bf16 %v353, %v353
        %v405 = vpack.c.bf16 %v401, %v400
        %v406 = vpack.c.bf16 %v403, %v402
        %407 = vxpose.xlu0.c.b16.start [1/8] %v404, 128
        %408 = vxpose.xlu0.c.b16.cont [2/8] 0, 128
        %409 = vxpose.xlu0.c.b16.cont [3/8] 0, 128
        %410 = vxpose.xlu0.c.b16.cont [4/8] 0, 128
        %411 = vxpose.xlu0.c.b16.cont [5/8] 0, 128
        %412 = vxpose.xlu0.c.b16.cont [6/8] 0, 128
        %413 = vxpose.xlu0.c.b16.cont [7/8] 0, 128
        %414 = vxpose.xlu0.c.b16.end [8/8] 0, 128
        %v415 = vpop.trf.xlu0
        %v416 = vpop.trf.xlu0
        %v417 = vpop.trf.xlu0
        %v418 = vpop.trf.xlu0
        %v419 = vpop.trf.xlu0
        %v420 = vpop.trf.xlu0
        %v421 = vpop.trf.xlu0
        %v422 = vpop.trf.xlu0
        %vm423 = vcmask 64512
        %v425 = vsel %vm423, %v415, 0
        %vm427 = vcmask 1043456
        %v429 = vsel %vm427, %v404, 0
        %431 = vmatprep.subr.bf16.mxu0 0
        %432 = vmatpush1.bf16.msra.mxu0 %v429
        %433 = vmatprep.subr.bf16.mxu0 0
        %434 = vmatpush1.bf16.msra.mxu0 0
        %435 = vmatprep.subr.bf16.mxu0 0
        %436 = vmatpush1.bf16.msra.mxu0 0
        %437 = vmatprep.subr.bf16.mxu0 0
        %438 = vmatpush1.bf16.msra.mxu0 0
        %439 = vmatprep.subr.bf16.mxu0 0
        %440 = vmatpush1.bf16.msra.mxu0 0
        %441 = vmatprep.subr.bf16.mxu0 0
        %442 = vmatpush1.bf16.msra.mxu0 0
        %443 = vmatprep.subr.bf16.mxu0 0
        %444 = vmatpush1.bf16.msra.mxu0 0
        %445 = vmatprep.subr.bf16.mxu0 0
        %446 = vmatpush1.bf16.msra.mxu0 0
        %447 = vmatprep.subr.bf16.mxu0 0
        %448 = vmatpush1.bf16.msra.mxu0 0
        %449 = vmatprep.subr.bf16.mxu0 0
        %450 = vmatpush1.bf16.msra.mxu0 0
        %451 = vmatprep.subr.bf16.mxu0 0
        %452 = vmatpush1.bf16.msra.mxu0 0
        %453 = vmatprep.subr.bf16.mxu0 0
        %454 = vmatpush1.bf16.msra.mxu0 0
        %455 = vmatprep.subr.bf16.mxu0 0
        %456 = vmatpush1.bf16.msra.mxu0 0
        %457 = vmatprep.subr.bf16.mxu0 0
        %458 = vmatpush1.bf16.msra.mxu0 0
        %459 = vmatprep.subr.bf16.mxu0 0
        %460 = vmatpush1.bf16.msra.mxu0 0
        %461 = vmatprep.subr.bf16.mxu0 0
        %462 = vmatpush1.bf16.msra.mxu0 0
        %463 = vmatprep.mubr.bf16.mxu0 0
        %464 = vmatmul.mubr.bf16.gmra.mrb[0].mxu0 %v425
        %v465 = vpop.f32.mrb[0].mxu0
        %v466 = vadd.f32 0.0, %v465
        %v467 = vpop.f32.mrb[0].mxu0
        %v468 = vpop.f32.mrb[0].mxu0
        %v469 = vadd.f32 0.0, %v468
        %v470 = vpop.f32.mrb[0].mxu0
        %471 = vdwg.mxu0
        %vm472 = vcmask 130048
        %v473 = vsel %vm472, %v466, -inf
        %474 = vmax.xlane.f32.xlu0 %v473
        %v475 = vpop.xlane.xlu0 %474
        %v476 = vsel %vm472, %v469, -inf
        %477 = vmax.xlane.f32.xlu0 %v476
        %v478 = vpop.xlane.xlu0 %477
        %v479 = vsub.f32 %v466, %v475
        %v480 = vsub.f32 %v469, %v478
        %v481 = vpack.c.bf16 %v480, %v479
        %v483 = vmul.bf16 %v481, 1069105081
        %v484 = vpow.bf16.pop %v483
        %v485 = vunpack.c.l.bf16 %v484
        %v486 = vunpack.c.h.bf16 %v484
        %v487 = vsel %vm472, %v485, 0.0
        %488 = vadd.xlane.f32.xlu0 %v487
        %v489 = vpop.xlane.xlu0 %488
        %v490 = vsel %vm472, %v486, 0.0
        %491 = vadd.xlane.f32.xlu0 %v490
        %v492 = vpop.xlane.xlu0 %491
        %v493 = vrcp.pop %v489
        %v494 = vrcp.pop %v492
        %v495 = vpack.c.bf16 %v494, %v493
        %v496 = vmul.bf16 %v484, %v495
        %v497 = vunpack.c.l.bf16 %v496
        %v498 = vunpack.c.h.bf16 %v496
        %v499 = vsel %vm472, %v497, 0.0
        %v500 = vsel %vm472, %v498, 0.0
        %v501 = vadd.f32 %v499, %v500
        %v502 = vrot.slane %v501, 4
        %v503 = vadd.f32 %v501, %v502
        %v504 = vrot.slane %v503, 2
        %v505 = vadd.f32 %v503, %v504
        %v506 = vrot.slane %v505, 1
        %v507 = vadd.f32 %v505, %v506
        %v508 = vadd.f32 %v507, 0.0
        %v510 = vsel %vm472, %v405, 0
        %v513 = vsel %vm472, %v406, 0
        %515 = vmatprep.subr.bf16.mxu0 0
        %516 = vmatpush1.bf16.msra.mxu0 %v496
        %517 = vmatprep.subr.bf16.mxu0 0
        %518 = vmatpush1.bf16.msra.mxu0 0
        %519 = vmatprep.subr.bf16.mxu0 0
        %520 = vmatpush1.bf16.msra.mxu0 0
        %521 = vmatprep.subr.bf16.mxu0 0
        %522 = vmatpush1.bf16.msra.mxu0 0
        %523 = vmatprep.subr.bf16.mxu0 0
        %524 = vmatpush1.bf16.msra.mxu0 0
        %525 = vmatprep.subr.bf16.mxu0 0
        %526 = vmatpush1.bf16.msra.mxu0 0
        %527 = vmatprep.subr.bf16.mxu0 0
        %528 = vmatpush1.bf16.msra.mxu0 0
        %529 = vmatprep.subr.bf16.mxu0 0
        %530 = vmatpush1.bf16.msra.mxu0 0
        %531 = vmatprep.subr.bf16.mxu0 0
        %532 = vmatpush1.bf16.msra.mxu0 0
        %533 = vmatprep.subr.bf16.mxu0 0
        %534 = vmatpush1.bf16.msra.mxu0 0
        %535 = vmatprep.subr.bf16.mxu0 0
        %536 = vmatpush1.bf16.msra.mxu0 0
        %537 = vmatprep.subr.bf16.mxu0 0
        %538 = vmatpush1.bf16.msra.mxu0 0
        %539 = vmatprep.subr.bf16.mxu0 0
        %540 = vmatpush1.bf16.msra.mxu0 0
        %541 = vmatprep.subr.bf16.mxu0 0
        %542 = vmatpush1.bf16.msra.mxu0 0
        %543 = vmatprep.subr.bf16.mxu0 0
        %544 = vmatpush1.bf16.msra.mxu0 0
        %545 = vmatprep.subr.bf16.mxu0 0
        %546 = vmatpush1.bf16.msra.mxu0 0
        %547 = vmatprep.mubr.bf16.mxu0 0
        %548 = vmatmul.mubr.bf16.gmra.mrb[0].mxu0 %v510
        %v549 = vpop.f32.mrb[0].mxu0
        %v550 = vadd.f32 0.0, %v549
        %v551 = vpop.f32.mrb[0].mxu0
        %v552 = vpop.f32.mrb[0].mxu0
        %v553 = vadd.f32 0.0, %v552
        %v554 = vpop.f32.mrb[0].mxu0
        %555 = vmatprep.mubr.bf16.mxu0 0
        %556 = vmatmul.mubr.bf16.gmra.mrb[0].mxu0 %v513
        %v557 = vpop.f32.mrb[0].mxu0
        %v558 = vadd.f32 0.0, %v557
        %v559 = vpop.f32.mrb[0].mxu0
        %v560 = vpop.f32.mrb[0].mxu0
        %v561 = vadd.f32 0.0, %v560
        %v562 = vpop.f32.mrb[0].mxu0
        %563 = vdwg.mxu0
        %v564 = vadd.f32 %v508, 1e-09
        %v565 = vrcp.pop %v564
        %v566 = vmul.f32 %v550, %v565
        %v567 = vmul.f32 %v553, %v565
        %v568 = vmul.f32 %v558, %v565
        %v569 = vmul.f32 %v561, %v565
        %v570 = vsub.f32 %v261, %v566
        %v571 = vsub.f32 %v262, %v567
        %v572 = vsub.f32 %v263, %v568
        %v573 = vsub.f32 %v264, %v569
        %v574 = vld [vmem:[#allocation8] sm:$0xff]
        %v575 = vld [vmem:[#allocation8 + $0x8] sm:$0xff]
        %v576 = vld [vmem:[#allocation8 + $0x10] sm:$0xff]
        %v577 = vld [vmem:[#allocation8 + $0x18] sm:$0xff]
        %v579 = vsel %vm270, %v574, 0
        %v582 = vsel %vm270, %v575, 0
        %v585 = vsel %vm270, %v576, 0
        %v588 = vsel %vm270, %v577, 0
        %590 = vmatprep.subr.mxu0 0.0
        %591 = vmatpush1.msra.mxu0 %v570
        %592 = vmatprep.subr.mxu0 0.0
        %593 = vmatpush1.msra.mxu0 %v571
        %594 = vmatprep.subr.mxu0 0.0
        %595 = vmatpush1.msra.mxu0 %v572
        %596 = vmatprep.subr.mxu0 0.0
        %597 = vmatpush1.msra.mxu0 %v573
        %598 = vmatprep.subr.mxu0 0.0
        %599 = vmatpush1.msra.mxu0 0.0
        %600 = vmatprep.subr.mxu0 0.0
        %601 = vmatpush1.msra.mxu0 0.0
        %602 = vmatprep.subr.mxu0 0.0
        %603 = vmatpush1.msra.mxu0 0.0
        %604 = vmatprep.subr.mxu0 0.0
        %605 = vmatpush1.msra.mxu0 0.0
        %606 = vmatprep.subr.mxu0 0.0
        %607 = vmatpush1.msra.mxu0 0.0
        %608 = vmatprep.subr.mxu0 0.0
        %609 = vmatpush1.msra.mxu0 0.0
        %610 = vmatprep.subr.mxu0 0.0
        %611 = vmatpush1.msra.mxu0 0.0
        %612 = vmatprep.subr.mxu0 0.0
        %613 = vmatpush1.msra.mxu0 0.0
        %614 = vmatprep.subr.mxu0 0.0
        %615 = vmatpush1.msra.mxu0 0.0
        %616 = vmatprep.subr.mxu0 0.0
        %617 = vmatpush1.msra.mxu0 0.0
        %618 = vmatprep.subr.mxu0 0.0
        %619 = vmatpush1.msra.mxu0 0.0
        %620 = vmatprep.subr.mxu0 0.0
        %621 = vmatpush1.msra.mxu0 0.0
        %622 = vmatprep.subr.mxu0 0.0
        %623 = vmatpush1.msra.mxu0 0.0
        %624 = vmatprep.subr.mxu0 0.0
        %625 = vmatpush1.msra.mxu0 0.0
        %626 = vmatprep.subr.mxu0 0.0
        %627 = vmatpush1.msra.mxu0 0.0
        %628 = vmatprep.subr.mxu0 0.0
        %629 = vmatpush1.msra.mxu0 0.0
        %630 = vmatprep.subr.mxu0 0.0
        %631 = vmatpush1.msra.mxu0 0.0
        %632 = vmatprep.subr.mxu0 0.0
        %633 = vmatpush1.msra.mxu0 0.0
        %634 = vmatprep.subr.mxu0 0.0
        %635 = vmatpush1.msra.mxu0 0.0
        %636 = vmatprep.subr.mxu0 0.0
        %637 = vmatpush1.msra.mxu0 0.0
        %638 = vmatprep.subr.mxu0 0.0
        %639 = vmatpush1.msra.mxu0 0.0
        %640 = vmatprep.subr.mxu0 0.0
        %641 = vmatpush1.msra.mxu0 0.0
        %642 = vmatprep.subr.mxu0 0.0
        %643 = vmatpush1.msra.mxu0 0.0
        %644 = vmatprep.subr.mxu0 0.0
        %645 = vmatpush1.msra.mxu0 0.0
        %646 = vmatprep.subr.mxu0 0.0
        %647 = vmatpush1.msra.mxu0 0.0
        %648 = vmatprep.subr.mxu0 0.0
        %649 = vmatpush1.msra.mxu0 0.0
        %650 = vmatprep.subr.mxu0 0.0
        %651 = vmatpush1.msra.mxu0 0.0
        %652 = vmatprep.subr.mxu0 0.0
        %653 = vmatpush1.msra.mxu0 0.0
        %654 = vmatprep.mubr.f32.mxu0 0.0
        %655 = vmatmul.mubr.f32.gmra.mrb[0].mxu0 %v579
        %v656 = vpop.f32.mrb[0].mxu0
        %v657 = vadd.f32 0.0, %v656
        %v658 = vpop.f32.mrb[0].mxu0
        %659 = vmatprep.mubr.f32.mxu0 0.0
        %660 = vmatmul.mubr.f32.gmra.mrb[0].mxu0 %v582
        %v661 = vpop.f32.mrb[0].mxu0
        %v662 = vadd.f32 0.0, %v661
        %v663 = vpop.f32.mrb[0].mxu0
        %664 = vmatprep.mubr.f32.mxu0 0.0
        %665 = vmatmul.mubr.f32.gmra.mrb[0].mxu0 %v585
        %v666 = vpop.f32.mrb[0].mxu0
        %v667 = vadd.f32 0.0, %v666
        %v668 = vpop.f32.mrb[0].mxu0
        %669 = vmatprep.mubr.f32.mxu0 0.0
        %670 = vmatmul.mubr.f32.gmra.mrb[0].mxu0 %v588
        %v671 = vpop.f32.mrb[0].mxu0
        %v672 = vadd.f32 0.0, %v671
        %v673 = vpop.f32.mrb[0].mxu0
        %674 = vdwg.mxu0
        %v675 = vpack.c.bf16 %v662, %v657
        %v676 = vpack.c.bf16 %v672, %v667
        %v679 = vunpack.c.l.b16 %v675
        %v680 = vunpack.c.h.b16 %v675
        %v681 = vunpack.c.l.b16 %v676
        %v682 = vunpack.c.h.b16 %v676
        %v683 = vpack.c.b16 %v679, %v679
        %v684 = vpack.c.b16 %v680, %v680
        %v685 = vpack.c.b16 %v681, %v681
        %v686 = vpack.c.b16 %v682, %v682
        %vm691 = vcmask 125952
        %692 = vst.msk [vmem:[%s259] sm:$0xf] %vm691, %v683
        %693 = vst.msk [vmem:[%s259 + $0x4] sm:$0xf] %vm691, %v684
        %694 = vst.msk [vmem:[%s259 + $0x8] sm:$0xf] %vm691, %v685
        %695 = vst.msk [vmem:[%s259 + $0xc] sm:$0xf] %vm691, %v686
        %s696 = sand.u32 %s120, 1
        %s697 = scalar_lea.sflag [#allocation4], %s696
        %s698 = sand.u32 %s120, 1
        %s699 = smul.addr %s698, 16
        %s700 = scalar_lea.vmem [#allocation10], %s699
        // Predicated region
        $region53: #{sa_layer.2} parent=35 // pred_check
          %p701 = pneg %p130
        $region54: #{sa_layer.2} parent=35 // pred_check_branch
          %703 = sbr.rel (%p701) target = $region56
        $region55: #{sa_layer.2} parent=35 // pred_region
          %s705 = ssub.s32 256, 256
          %706 = vsyncadd %s697, %s705
          %s707 = smul.addr %s23, 4
          %s708 = smul.addr %s707, 64
          %s709 = scalar_lea.hbm %s4, %s708
          %s710 = sshll.u32 %s700, 4
          %s711 = int_to_ptr.vmem [resolvable:$true] %s710
          %716 = dma.vmem_to_hbm [thread:$0]  %s711, 256, %s709, %s697, 64, 64, 4
        $region56: #{sa_layer.2} parent=35 // pred_fallthru
          _
      $region36: #{sa_layer.2} parent=5 // pred_fallthru
        _
      %p717 = scmp.le.s32.totalorder 2, %s18
      // Predicated region
      $region57: #{sa_layer.2} parent=5 // pred_check
        %p718 = pneg %p717
      $region58: #{sa_layer.2} parent=5 // pred_check_branch
        %720 = sbr.rel (%p718) target = $region60
      $region59: #{sa_layer.2} parent=5 // pred_region
        %s721 = ssub.s32 %s18, 2
        // Predicated region
        $region61: #{sa_layer.2} parent=59 // pred_check
          %p722 = pneg %p136
        $region62: #{sa_layer.2} parent=59 // pred_check_branch
          %724 = sbr.rel (%p722) target = $region64
        $region63: #{sa_layer.2} parent=59 // pred_region
          %s725 = sand.u32 %s121, 1
          %s726 = scalar_lea.sflag [#allocation4], %s725
          %s727 = sand.u32 %s121, 1
          %s728 = smul.addr %s727, 16
          %s729 = scalar_lea.vmem [#allocation10], %s728
          %730 = dma.done %s726, 256
        $region64: #{sa_layer.2} parent=59 // pred_fallthru
          _
      $region60: #{sa_layer.2} parent=5 // pred_fallthru
        _
    $region6: #{sa_layer.2} parent=1 // loop_footer
      %s22 = sadd.s32 1, %s18
    $region7: #{sa_layer.2} parent=1 // loop_footer_branch
      %17 = sbr.rel target = $region3
    $region8: #{sa_layer.2} parent=1 // loop_exit
      _
    %731 = vsyncpa [#allocation3], 1
    %s732 = scalar_lea.sflag [#allocation3], 1
    %733 = vsyncpa %s732, 1
    %734 = vsyncpa [#allocation6], 1
    %735 = vsyncpa [#allocation9], 1
    %736 = vsyncpa [#allocation4], 1
    %s737 = scalar_lea.sflag [#allocation4], 1
    %738 = vsyncpa %s737, 1

// kernel: sa_layer.3
$region0: #{sa_layer.3}
  #allocation0 [shape = 'u32[]', space=smem, size = 0x4, offset = 0x4, fixed_abs, tag = 'smem constant byte address 0x4 - core index']
  #allocation1 [shape = 'u32[144,128]{1,0:T(1,128)}', space=vmem, size = 0x12000, scoped, tag = 'internal scratch']
  %s0 = inlined_call_operand.hbm [shape: bf16[2,32,16], index: 0, kind: input, shape index: {}]
  %s1 = inlined_call_operand.hbm [shape: f32[2,32,16], index: 1, kind: input, shape index: {}]
  %s2 = inlined_call_operand.hbm [shape: f32[32,1], index: 2, kind: input, shape index: {}]
  %s3 = inlined_call_operand.hbm [shape: f32[32,1], index: 3, kind: input, shape index: {}]
  %s4 = inlined_call_operand.hbm [shape: f32[2,32,16], index: 4, kind: output, shape index: {}]
  %s5 = sld [smem:[#allocation0]]
  $region42: #{sa_layer.3} parent=0
    _
  %s7 = ssub.s32 1, %s5
  %s8 = scalar_select 0, %s7, %s5
  $region1: #{sa_layer.3} parent=0
    #allocation2 [shape = 'u8[16384]{0}', space=vmem, size = 0x4000, scoped, tag = 'input window, operand 0, single buffered']
    #allocation3 [shape = 's32[1]{0}', space=sflag, size = 0x4, scoped, tag = 'scoped memory for sa_layer.3']
    #allocation4 [shape = 's32[1]{0}', space=sflag, size = 0x4, scoped, tag = 'scoped memory for sa_layer.3']
    #allocation5 [shape = 'u8[32768]{0}', space=vmem, size = 0x8000, scoped, tag = 'input window, operand 1, single buffered']
    #allocation6 [shape = 's32[1]{0}', space=sflag, size = 0x4, scoped, tag = 'scoped memory for sa_layer.3']
    #allocation7 [shape = 'u8[16384]{0}', space=vmem, size = 0x4000, scoped, tag = 'input window, operand 2, single buffered']
    #allocation8 [shape = 'u8[16384]{0}', space=vmem, size = 0x4000, scoped, tag = 'input window, operand 3, single buffered']
    #allocation9 [shape = 's32[1]{0}', space=sflag, size = 0x4, scoped, tag = 'scoped memory for sa_layer.3']
    #allocation10 [shape = 'u8[32768]{0}', space=vmem, size = 0x8000, scoped, tag = 'output window, operand 0, single buffered']
    %9 = vsyncpa [#allocation3], 0
    %10 = vsyncpa [#allocation6], 0
    %11 = vsyncpa [#allocation9], 0
    %12 = vsyncpa [#allocation4], 0
    // Predicated region
    $region2: #{sa_layer.3} parent=1 // pred_check
      _
    $region3: #{sa_layer.3} parent=1 // pred_check_branch
      %14 = sbr.rel (0) target = $region5
    $region4: #{sa_layer.3} parent=1 // pred_region
      %s16 = ssub.s32 512, 512
      %17 = vsyncadd [#allocation3], %s16
      %s18 = sshll.u32 [#allocation2], 4
      %s19 = int_to_ptr.vmem [resolvable:$true] %s18
      %24 = dma.hbm_to_vmem [thread:$0]  %s0, 512, %s19, [#allocation3], 64, 64, 4
    $region5: #{sa_layer.3} parent=1 // pred_fallthru
      _
    // Predicated region
    $region6: #{sa_layer.3} parent=1 // pred_check
      _
    $region7: #{sa_layer.3} parent=1 // pred_check_branch
      %26 = sbr.rel (0) target = $region9
    $region8: #{sa_layer.3} parent=1 // pred_region
      %s28 = ssub.s32 1024, 1024
      %29 = vsyncadd [#allocation6], %s28
      %s30 = sshll.u32 [#allocation5], 4
      %s31 = int_to_ptr.vmem [resolvable:$true] %s30
      %36 = dma.hbm_to_vmem [thread:$0]  %s1, 1024, %s31, [#allocation6], 128, 128, 8
    $region9: #{sa_layer.3} parent=1 // pred_fallthru
      _
    // Predicated region
    $region10: #{sa_layer.3} parent=1 // pred_check
      _
    $region11: #{sa_layer.3} parent=1 // pred_check_branch
      %38 = sbr.rel (0) target = $region13
    $region12: #{sa_layer.3} parent=1 // pred_region
      %s40 = ssub.s32 512, 512
      %41 = vsyncadd [#allocation6], %s40
      %s42 = sshll.u32 [#allocation7], 4
      %s43 = int_to_ptr.vmem [resolvable:$true] %s42
      %48 = dma.hbm_to_vmem [thread:$0]  %s2, 512, %s43, [#allocation6], 128, 128, 8
    $region13: #{sa_layer.3} parent=1 // pred_fallthru
      _
    // Predicated region
    $region14: #{sa_layer.3} parent=1 // pred_check
      _
    $region15: #{sa_layer.3} parent=1 // pred_check_branch
      %50 = sbr.rel (0) target = $region17
    $region16: #{sa_layer.3} parent=1 // pred_region
      %s52 = ssub.s32 512, 512
      %53 = vsyncadd [#allocation9], %s52
      %s54 = sshll.u32 [#allocation8], 4
      %s55 = int_to_ptr.vmem [resolvable:$true] %s54
      %60 = dma.hbm_to_vmem [thread:$0]  %s3, 512, %s55, [#allocation9], 128, 128, 8
    $region17: #{sa_layer.3} parent=1 // pred_fallthru
      _
    // Predicated region
    $region18: #{sa_layer.3} parent=1 // pred_check
      _
    $region19: #{sa_layer.3} parent=1 // pred_check_branch
      %62 = sbr.rel (0) target = $region21
    $region20: #{sa_layer.3} parent=1 // pred_region
      %63 = dma.done [#allocation3], 512
    $region21: #{sa_layer.3} parent=1 // pred_fallthru
      _
    // Predicated region
    $region22: #{sa_layer.3} parent=1 // pred_check
      _
    $region23: #{sa_layer.3} parent=1 // pred_check_branch
      %65 = sbr.rel (0) target = $region25
    $region24: #{sa_layer.3} parent=1 // pred_region
      %66 = dma.done [#allocation6], 1024
    $region25: #{sa_layer.3} parent=1 // pred_fallthru
      _
    // Predicated region
    $region26: #{sa_layer.3} parent=1 // pred_check
      _
    $region27: #{sa_layer.3} parent=1 // pred_check_branch
      %68 = sbr.rel (0) target = $region29
    $region28: #{sa_layer.3} parent=1 // pred_region
      %69 = dma.done [#allocation6], 512
    $region29: #{sa_layer.3} parent=1 // pred_fallthru
      _
    // Predicated region
    $region30: #{sa_layer.3} parent=1 // pred_check
      _
    $region31: #{sa_layer.3} parent=1 // pred_check_branch
      %71 = sbr.rel (0) target = $region33
    $region32: #{sa_layer.3} parent=1 // pred_region
      %72 = dma.done [#allocation9], 512
    $region33: #{sa_layer.3} parent=1 // pred_fallthru
      _
    %v73 = vld [vmem:[#allocation2] sm:$0xf]
    %v74 = vld [vmem:[#allocation2 + $0x4] sm:$0xf]
    %v75 = vld [vmem:[#allocation2 + $0x8] sm:$0xf]
    %v76 = vld [vmem:[#allocation2 + $0xc] sm:$0xf]
    %v77 = vld [vmem:[#allocation2 + $0x10] sm:$0xf]
    %v78 = vld [vmem:[#allocation2 + $0x14] sm:$0xf]
    %v79 = vld [vmem:[#allocation2 + $0x18] sm:$0xf]
    %v80 = vld [vmem:[#allocation2 + $0x1c] sm:$0xf]
    %v81 = vunpack.c.l.bf16 %v73
    %v82 = vunpack.c.l.bf16 %v74
    %v83 = vunpack.c.l.bf16 %v75
    %v84 = vunpack.c.l.bf16 %v76
    %v85 = vunpack.c.l.bf16 %v77
    %v86 = vunpack.c.l.bf16 %v78
    %v87 = vunpack.c.l.bf16 %v79
    %v88 = vunpack.c.l.bf16 %v80
    %vm89 = vcmask 130048
    %v90 = vsel %vm89, %v81, 0.0
    %v91 = vsel %vm89, %v85, 0.0
    %v92 = vadd.f32 %v90, %v91
    %93 = vadd.xlane.f32.xlu0 %v92
    %v94 = vpop.xlane.xlu0 %93
    %v95 = vsel %vm89, %v82, 0.0
    %v96 = vsel %vm89, %v86, 0.0
    %v97 = vadd.f32 %v95, %v96
    %98 = vadd.xlane.f32.xlu0 %v97
    %v99 = vpop.xlane.xlu0 %98
    %v100 = vsel %vm89, %v83, 0.0
    %v101 = vsel %vm89, %v87, 0.0
    %v102 = vadd.f32 %v100, %v101
    %103 = vadd.xlane.f32.xlu0 %v102
    %v104 = vpop.xlane.xlu0 %103
    %v105 = vsel %vm89, %v84, 0.0
    %v106 = vsel %vm89, %v88, 0.0
    %v107 = vadd.f32 %v105, %v106
    %108 = vadd.xlane.f32.xlu0 %v107
    %v109 = vpop.xlane.xlu0 %108
    %v110 = vmul.f32 %v81, %v81
    %v111 = vmul.f32 %v82, %v82
    %v112 = vmul.f32 %v83, %v83
    %v113 = vmul.f32 %v84, %v84
    %v114 = vmul.f32 %v85, %v85
    %v115 = vmul.f32 %v86, %v86
    %v116 = vmul.f32 %v87, %v87
    %v117 = vmul.f32 %v88, %v88
    %v118 = vsel %vm89, %v110, 0.0
    %v119 = vsel %vm89, %v114, 0.0
    %v120 = vadd.f32 %v118, %v119
    %121 = vadd.xlane.f32.xlu0 %v120
    %v122 = vpop.xlane.xlu0 %121
    %v123 = vsel %vm89, %v111, 0.0
    %v124 = vsel %vm89, %v115, 0.0
    %v125 = vadd.f32 %v123, %v124
    %126 = vadd.xlane.f32.xlu0 %v125
    %v127 = vpop.xlane.xlu0 %126
    %v128 = vsel %vm89, %v112, 0.0
    %v129 = vsel %vm89, %v116, 0.0
    %v130 = vadd.f32 %v128, %v129
    %131 = vadd.xlane.f32.xlu0 %v130
    %v132 = vpop.xlane.xlu0 %131
    %v133 = vsel %vm89, %v113, 0.0
    %v134 = vsel %vm89, %v117, 0.0
    %v135 = vadd.f32 %v133, %v134
    %136 = vadd.xlane.f32.xlu0 %v135
    %v137 = vpop.xlane.xlu0 %136
    %v138 = vmul.f32 %v94, 0.03125
    %v139 = vmul.f32 %v99, 0.03125
    %v140 = vmul.f32 %v104, 0.03125
    %v141 = vmul.f32 %v109, 0.03125
    %v142 = vmul.f32 %v122, 0.03125
    %v143 = vmul.f32 %v127, 0.03125
    %v144 = vmul.f32 %v132, 0.03125
    %v145 = vmul.f32 %v137, 0.03125
    %v146 = vmul.f32 %v138, %v138
    %v147 = vmul.f32 %v139, %v139
    %v148 = vmul.f32 %v140, %v140
    %v149 = vmul.f32 %v141, %v141
    %v150 = vsub.f32 %v142, %v146
    %v151 = vsub.f32 %v143, %v147
    %v152 = vsub.f32 %v144, %v148
    %v153 = vsub.f32 %v145, %v149
    %v154 = vld [vmem:[#allocation7] sm:$0xff]
    %v155 = vld [vmem:[#allocation7 + $0x8] sm:$0xff]
    %v156 = vld [vmem:[#allocation7 + $0x10] sm:$0xff]
    %v157 = vld [vmem:[#allocation7 + $0x18] sm:$0xff]
    %v158 = vld [vmem:[#allocation8] sm:$0xff]
    %v159 = vld [vmem:[#allocation8 + $0x8] sm:$0xff]
    %v160 = vld [vmem:[#allocation8 + $0x10] sm:$0xff]
    %v161 = vld [vmem:[#allocation8 + $0x18] sm:$0xff]
    %v162 = vadd.f32 %v150, 1e-05
    %v163 = vadd.f32 %v151, 1e-05
    %v164 = vadd.f32 %v152, 1e-05
    %v165 = vadd.f32 %v153, 1e-05
    %v166 = vrsqrt.pop %v162
    %v167 = vrsqrt.pop %v163
    %v168 = vrsqrt.pop %v164
    %v169 = vrsqrt.pop %v165
    %v170 = vmul.f32 %v166, %v154
    %v171 = vmul.f32 %v167, %v155
    %v172 = vmul.f32 %v168, %v156
    %v173 = vmul.f32 %v169, %v157
    %v174 = vsub.f32 %v81, %v138
    %v175 = vsub.f32 %v82, %v139
    %v176 = vsub.f32 %v83, %v140
    %v177 = vsub.f32 %v84, %v141
    %v178 = vsub.f32 %v85, %v138
    %v179 = vsub.f32 %v86, %v139
    %v180 = vsub.f32 %v87, %v140
    %v181 = vsub.f32 %v88, %v141
    %183 = vset.pattern.permute.xlu0 0
    %184 = vperm.xlu0 %183, %v170
    %v185 = vpop.permute.xlu0 %184
    %188 = vset.pattern.permute.xlu0 0
    %189 = vperm.xlu0 %188, %v171
    %v190 = vpop.permute.xlu0 %189
    %193 = vset.pattern.permute.xlu0 0
    %194 = vperm.xlu0 %193, %v172
    %v195 = vpop.permute.xlu0 %194
    %198 = vset.pattern.permute.xlu0 0
    %199 = vperm.xlu0 %198, %v173
    %v200 = vpop.permute.xlu0 %199
    %v202 = vmul.f32 %v174, %v185
    %v203 = vmul.f32 %v175, %v190
    %v204 = vmul.f32 %v176, %v195
    %v205 = vmul.f32 %v177, %v200
    %v206 = vmul.f32 %v178, %v185
    %v207 = vmul.f32 %v179, %v190
    %v208 = vmul.f32 %v180, %v195
    %v209 = vmul.f32 %v181, %v200
    %211 = vset.pattern.permute.xlu0 0
    %212 = vperm.xlu0 %211, %v158
    %v213 = vpop.permute.xlu0 %212
    %216 = vset.pattern.permute.xlu0 0
    %217 = vperm.xlu0 %216, %v159
    %v218 = vpop.permute.xlu0 %217
    %221 = vset.pattern.permute.xlu0 0
    %222 = vperm.xlu0 %221, %v160
    %v223 = vpop.permute.xlu0 %222
    %226 = vset.pattern.permute.xlu0 0
    %227 = vperm.xlu0 %226, %v161
    %v228 = vpop.permute.xlu0 %227
    %v230 = vadd.f32 %v202, %v213
    %v231 = vadd.f32 %v203, %v218
    %v232 = vadd.f32 %v204, %v223
    %v233 = vadd.f32 %v205, %v228
    %v234 = vadd.f32 %v206, %v213
    %v235 = vadd.f32 %v207, %v218
    %v236 = vadd.f32 %v208, %v223
    %v237 = vadd.f32 %v209, %v228
    %v238 = vld [vmem:[#allocation5] sm:$0xff]
    %v239 = vld [vmem:[#allocation5 + $0x8] sm:$0xff]
    %v240 = vld [vmem:[#allocation5 + $0x10] sm:$0xff]
    %v241 = vld [vmem:[#allocation5 + $0x18] sm:$0xff]
    %v242 = vld [vmem:[#allocation5 + $0x20] sm:$0xff]
    %v243 = vld [vmem:[#allocation5 + $0x28] sm:$0xff]
    %v244 = vld [vmem:[#allocation5 + $0x30] sm:$0xff]
    %v245 = vld [vmem:[#allocation5 + $0x38] sm:$0xff]
    %v246 = vmax.f32 %v230, 0.0
    %v247 = vmax.f32 %v231, 0.0
    %v248 = vmax.f32 %v232, 0.0
    %v249 = vmax.f32 %v233, 0.0
    %v250 = vmax.f32 %v234, 0.0
    %v251 = vmax.f32 %v235, 0.0
    %v252 = vmax.f32 %v236, 0.0
    %v253 = vmax.f32 %v237, 0.0
    %v254 = vadd.f32 %v238, %v246
    %v255 = vadd.f32 %v239, %v247
    %v256 = vadd.f32 %v240, %v248
    %v257 = vadd.f32 %v241, %v249
    %v258 = vadd.f32 %v242, %v250
    %v259 = vadd.f32 %v243, %v251
    %v260 = vadd.f32 %v244, %v252
    %v261 = vadd.f32 %v245, %v253
    %262 = vst.msk [vmem:[#allocation10] sm:$0xff] %vm89, %v254
    %263 = vst.msk [vmem:[#allocation10 + $0x8] sm:$0xff] %vm89, %v255
    %264 = vst.msk [vmem:[#allocation10 + $0x10] sm:$0xff] %vm89, %v256
    %265 = vst.msk [vmem:[#allocation10 + $0x18] sm:$0xff] %vm89, %v257
    %266 = vst.msk [vmem:[#allocation10 + $0x20] sm:$0xff] %vm89, %v258
    %267 = vst.msk [vmem:[#allocation10 + $0x28] sm:$0xff] %vm89, %v259
    %268 = vst.msk [vmem:[#allocation10 + $0x30] sm:$0xff] %vm89, %v260
    %269 = vst.msk [vmem:[#allocation10 + $0x38] sm:$0xff] %vm89, %v261
    // Predicated region
    $region34: #{sa_layer.3} parent=1 // pred_check
      _
    $region35: #{sa_layer.3} parent=1 // pred_check_branch
      %271 = sbr.rel (0) target = $region37
    $region36: #{sa_layer.3} parent=1 // pred_region
      %s273 = ssub.s32 1024, 1024
      %274 = vsyncadd [#allocation4], %s273
      %s275 = sshll.u32 [#allocation10], 4
      %s276 = int_to_ptr.vmem [resolvable:$true] %s275
      %281 = dma.vmem_to_hbm [thread:$0]  %s276, 1024, %s4, [#allocation4], 128, 128, 8
    $region37: #{sa_layer.3} parent=1 // pred_fallthru
      _
    // Predicated region
    $region38: #{sa_layer.3} parent=1 // pred_check
      _
    $region39: #{sa_layer.3} parent=1 // pred_check_branch
      %283 = sbr.rel (0) target = $region41
    $region40: #{sa_layer.3} parent=1 // pred_region
      %284 = dma.done [#allocation4], 1024
    $region41: #{sa_layer.3} parent=1 // pred_fallthru
      _
    %285 = vsyncpa [#allocation3], 1
    %286 = vsyncpa [#allocation6], 1
    %287 = vsyncpa [#allocation9], 1
    %288 = vsyncpa [#allocation4], 1

</llo_original>
